<compile_context>
chip_gen: v7x
topology: tpu7x:2x2x1
jax: 0.10.0
libtpu: 0.0.40
codegen_flags: <defaults>
</compile_context>

<pallas_src>
import functools

import jax
import jax.numpy as jnp
from jax.experimental import pallas as pl
from jax.experimental.pallas import tpu as pltpu


def _round_up(a, b):
    return (a + b - 1) // b * b


def _special_last_layer_kernel(x_ref, w_ref, o_ref, *, compute_dtype):
    # x_ref: (tile_m, in_p)   w_ref: (in_p, out_p)   o_ref: (tile_m, out_p)
    xv = x_ref[...]
    if xv.dtype != compute_dtype:
        xv = xv.astype(compute_dtype)  # in-kernel VPU cast: no extra HBM pass
    acc = jnp.dot(xv, w_ref[...], preferred_element_type=jnp.float32)
    o_ref[...] = acc.astype(o_ref.dtype)


def special_last_layer(x, weight, *, tile_m=None, compute_dtype=None):
    """Forward of Special_last_layer.

    x:      (B, 1, H, in_p)       NCHW activation
    weight: (out_p, 1, 1, in_p)   nn.Conv2d(1, out_p, (1, in_p), bias=False) weight
    returns (B, 1, H, out_p), matching conv(x).moveaxis(0, -1).T
    """
    B, C, H, W = x.shape
    assert C == 1, "Special_last_layer expects a single input channel"
    out_p, cin, kh, in_p = weight.shape
    assert cin == 1 and kh == 1 and in_p == W

    out_dtype = x.dtype
    cdt = jnp.dtype(compute_dtype) if compute_dtype is not None else jnp.dtype(x.dtype)

    M = B * H
    x2d = x.reshape(M, in_p)                              # metadata-only reshape
    w2d = weight.reshape(out_p, in_p).T.astype(cdt)       # (in_p, out_p), tiny host op

    # Tile sizing: largest M tile under a conservative VMEM budget.  The footprint
    # accounts for lane padding to 128 in VMEM and double-buffering of the x/out
    # blocks; the resident weight is counted twice as a worst case.  Capped at 4096
    # rows so very large M still yields multi-step grids (v7x 2-TC sharding) while
    # small problems collapse to a single step (no pipeline overhead).
    sub = 8
    if tile_m is None:
        budget = 24 * 1024 * 1024  # safely under the 32 MiB default scoped VMEM
        per_row = (2 * _round_up(in_p, 128) * x2d.dtype.itemsize
                   + 2 * _round_up(out_p, 128) * jnp.dtype(out_dtype).itemsize)
        w_bytes = 2 * _round_up(in_p, sub) * _round_up(out_p, 128) * cdt.itemsize
        fit = max(sub, (budget - w_bytes) // max(per_row, 1))
        tile_m = int(min(fit, 4096))
    tile_m = max(sub, (int(tile_m) // sub) * sub)
    tile_m = min(tile_m, _round_up(M, sub))

    grid = (pl.cdiv(M, tile_m),)

    cost = pl.CostEstimate(
        flops=int(2 * M * in_p * out_p),
        transcendentals=0,
        bytes_accessed=int(M * in_p * x2d.dtype.itemsize
                           + in_p * out_p * cdt.itemsize
                           + M * out_p * jnp.dtype(out_dtype).itemsize),
    )

    y = pl.pallas_call(
        functools.partial(_special_last_layer_kernel, compute_dtype=cdt),
        out_shape=jax.ShapeDtypeStruct((M, out_p), out_dtype),
        grid_spec=pltpu.PrefetchScalarGridSpec(
            num_scalar_prefetch=0,
            grid=grid,
            in_specs=[
                pl.BlockSpec((tile_m, in_p), lambda i: (i, 0)),
                pl.BlockSpec((in_p, out_p), lambda i: (0, 0)),  # resident weight
            ],
            out_specs=pl.BlockSpec((tile_m, out_p), lambda i: (i, 0)),
        ),
        compiler_params=pltpu.CompilerParams(
            dimension_semantics=("parallel",),
        ),
        cost_estimate=cost,
    )(x2d, w2d)

    # Matches conv(x).moveaxis(0, -1).T -> (B, 1, H, out_p); metadata-only reshape.
    return y.reshape(B, H, out_p)[:, None, :, :]


if __name__ == "__main__":
    # Small shapes consistent with the module's forward.
    B, H = 2, 8
    in_p_size, out_p_size = 16, 32

    key = jax.random.PRNGKey(0)
    kx, kw = jax.random.split(key)
    x = jax.random.normal(kx, (B, 1, H, in_p_size), dtype=jnp.float32)
    # Deterministic synthetic Conv2d weight (out_p, 1, 1, in_p), no bias.
    weight = (
        jax.random.normal(kw, (out_p_size, 1, 1, in_p_size), dtype=jnp.float32)
        * (1.0 / jnp.sqrt(in_p_size))
    )

    # Default path: f32 end-to-end, matches the PyTorch forward tightly.
    out = jax.block_until_ready(special_last_layer(x, weight))
    ref = jnp.einsum("bhw,ow->bho", x[:, 0], weight[:, 0, 0])[:, None, :, :]
    assert out.shape == (B, 1, H, out_p_size), out.shape
    assert jnp.allclose(out, ref, atol=1e-4, rtol=1e-4), float(
        jnp.max(jnp.abs(out - ref))
    )

    # Opt-in bf16 compute path (cast done inside the kernel, f32 accumulation).
    out_bf16 = jax.block_until_ready(
        special_last_layer(x, weight, compute_dtype=jnp.bfloat16)
    )
    xb = x.astype(jnp.bfloat16).astype(jnp.float32)
    wb = weight.astype(jnp.bfloat16).astype(jnp.float32)
    ref_bf = jnp.einsum("bhw,ow->bho", xb[:, 0], wb[:, 0, 0])[:, None, :, :]
    assert jnp.allclose(out_bf16, ref_bf, atol=5e-3, rtol=5e-3), float(
        jnp.max(jnp.abs(out_bf16 - ref_bf))
    )

    print("KERNEL_OK")
</pallas_src>

<mosaic_0001>
module attributes {stable_mosaic.version = 11 : i64} {
  func.func @_special_last_layer_kernel(%arg0: i32, %arg1: memref<16x16xf32, #tpu.memory_space<vmem>>, %arg2: memref<16x32xf32, #tpu.memory_space<vmem>>, %arg3: memref<16x32xf32, #tpu.memory_space<vmem>>) attributes {dimension_semantics = [#tpu.dimension_semantics<parallel>], iteration_bounds = array<i64: 1>, scalar_prefetch = 0 : i64, scratch_operands = 0 : i64, tpu.core_type = #tpu.core_type<tc>, window_params = [{transform_indices = @transform_0, window_bounds = array<i64: 16, 16>}, {pipeline_mode = #tpu.pipeline_mode<synchronous>, transform_indices = @transform_1, window_bounds = array<i64: 16, 32>}, {transform_indices = @transform_2, window_bounds = array<i64: 16, 32>}]} {
    %c0 = arith.constant 0 : index
    %c0_0 = arith.constant 0 : index
    %0 = vector.load %arg1[%c0, %c0_0] : memref<16x16xf32, #tpu.memory_space<vmem>>, vector<16x16xf32>
    %c0_1 = arith.constant 0 : index
    %c0_2 = arith.constant 0 : index
    %1 = vector.load %arg2[%c0_1, %c0_2] : memref<16x32xf32, #tpu.memory_space<vmem>>, vector<16x32xf32>
    %cst = arith.constant dense<0.000000e+00> : vector<16x32xf32>
    %2 = tpu.matmul %0, %1, %cst {dimension_numbers = #tpu.dot_dimension_numbers<[1], [0], [0], [1], [0, 0, 1, 1], [], []>} : vector<16x16xf32>, vector<16x32xf32>, vector<16x32xf32> -> vector<16x32xf32>
    %c0_3 = arith.constant 0 : index
    %c0_4 = arith.constant 0 : index
    %3 = vector.load %arg3[%c0_3, %c0_4] : memref<16x32xf32, #tpu.memory_space<vmem>>, vector<16x32xf32>
    tpu.vector_store %arg3[%c0_3, %c0_4], %2 {strides = array<i32>} : memref<16x32xf32, #tpu.memory_space<vmem>>, vector<16x32xf32>,
    return
  }
  func.func @transform_0(%arg0: i32) -> (i32, i32) {
    %c0_i32 = arith.constant 0 : i32
    %c0_i32_0 = arith.constant 0 : i32
    return %arg0, %c0_i32 : i32, i32
  }
  func.func @transform_1(%arg0: i32) -> (i32, i32) {
    %c0_i32 = arith.constant 0 : i32
    %c0_i32_0 = arith.constant 0 : i32
    %c0_i32_1 = arith.constant 0 : i32
    return %c0_i32, %c0_i32_0 : i32, i32
  }
  func.func @transform_2(%arg0: i32) -> (i32, i32) {
    %c0_i32 = arith.constant 0 : i32
    %c0_i32_0 = arith.constant 0 : i32
    return %arg0, %c0_i32 : i32, i32
  }
}

</mosaic_0001>

<llo_original>
// kernel: tpu_custom_call.1
$region0: #{tpu_custom_call.1}
  #allocation0 [shape = 'u32[]', space=smem, size = 0x4, offset = 0x4, fixed_abs, tag = 'smem constant byte address 0x4 - core index']
  #allocation1 [shape = 'u32[144,128]{1,0:T(1,128)}', space=vmem, size = 0x12000, scoped, tag = 'internal scratch']
  %s0 = inlined_call_operand.hbm [shape: f32[16,16], index: 0, kind: input, shape index: {}]
  %s1 = inlined_call_operand.hbm [shape: f32[16,32], index: 1, kind: input, shape index: {}]
  %s2 = inlined_call_operand.hbm [shape: f32[16,32], index: 2, kind: output, shape index: {}]
  %s3 = sld [smem:[#allocation0]]
  $region26: #{tpu_custom_call.1} parent=0
    _
  %s5 = ssub.s32 1, %s3
  %s6 = scalar_select 0, %s5, %s3
  $region1: #{tpu_custom_call.1} parent=0
    #allocation2 [shape = 'u8[8192]{0}', space=vmem, size = 0x2000, scoped, tag = 'input window, operand 0, single buffered']
    #allocation3 [shape = 's32[1]{0}', space=sflag, size = 0x4, scoped, tag = 'scoped memory for tpu_custom_call.1']
    #allocation4 [shape = 's32[1]{0}', space=sflag, size = 0x4, scoped, tag = 'scoped memory for tpu_custom_call.1']
    #allocation5 [shape = 'u8[8192]{0}', space=vmem, size = 0x2000, scoped, tag = 'input window, operand 1, single buffered']
    #allocation6 [shape = 's32[1]{0}', space=sflag, size = 0x4, scoped, tag = 'scoped memory for tpu_custom_call.1']
    #allocation7 [shape = 'u8[8192]{0}', space=vmem, size = 0x2000, scoped, tag = 'output window, operand 0, single buffered']
    %7 = vsyncpa [#allocation3], 0
    %8 = vsyncpa [#allocation6], 0
    %9 = vsyncpa [#allocation4], 0
    // Predicated region
    $region2: #{tpu_custom_call.1} parent=1 // pred_check
      _
    $region3: #{tpu_custom_call.1} parent=1 // pred_check_branch
      %11 = sbr.rel (0) target = $region5
    $region4: #{tpu_custom_call.1} parent=1 // pred_region
      %s13 = ssub.s32 256, 256
      %14 = vsyncadd [#allocation3], %s13
      %s15 = sshll.u32 [#allocation2], 4
      %s16 = int_to_ptr.vmem [resolvable:$true] %s15
      %21 = dma.hbm_to_vmem [thread:$0]  %s0, 256, %s16, [#allocation3], 128, 128, 8
    $region5: #{tpu_custom_call.1} parent=1 // pred_fallthru
      _
    // Predicated region
    $region6: #{tpu_custom_call.1} parent=1 // pred_check
      _
    $region7: #{tpu_custom_call.1} parent=1 // pred_check_branch
      %23 = sbr.rel (0) target = $region9
    $region8: #{tpu_custom_call.1} parent=1 // pred_region
      %s25 = ssub.s32 256, 256
      %26 = vsyncadd [#allocation6], %s25
      %s27 = sshll.u32 [#allocation5], 4
      %s28 = int_to_ptr.vmem [resolvable:$true] %s27
      %33 = dma.hbm_to_vmem [thread:$0]  %s1, 256, %s28, [#allocation6], 128, 128, 8
    $region9: #{tpu_custom_call.1} parent=1 // pred_fallthru
      _
    // Predicated region
    $region10: #{tpu_custom_call.1} parent=1 // pred_check
      _
    $region11: #{tpu_custom_call.1} parent=1 // pred_check_branch
      %35 = sbr.rel (0) target = $region13
    $region12: #{tpu_custom_call.1} parent=1 // pred_region
      %36 = dma.done [#allocation3], 256
    $region13: #{tpu_custom_call.1} parent=1 // pred_fallthru
      _
    // Predicated region
    $region14: #{tpu_custom_call.1} parent=1 // pred_check
      _
    $region15: #{tpu_custom_call.1} parent=1 // pred_check_branch
      %38 = sbr.rel (0) target = $region17
    $region16: #{tpu_custom_call.1} parent=1 // pred_region
      %39 = dma.done [#allocation6], 256
    $region17: #{tpu_custom_call.1} parent=1 // pred_fallthru
      _
    %v40 = vld [vmem:[#allocation2] sm:$0xff]
    %v41 = vld [vmem:[#allocation2 + $0x8] sm:$0xff]
    %v42 = vld [vmem:[#allocation5] sm:$0xff]
    %v43 = vld [vmem:[#allocation5 + $0x8] sm:$0xff]
    %vm44 = vcmask 130048
    %v46 = vsel %vm44, %v40, 0
    %v49 = vsel %vm44, %v41, 0
    %51 = vmatprep.subr.mxu0 0.0
    %52 = vmatpush1.msra.mxu0 %v42
    %53 = vmatprep.subr.mxu0 0.0
    %54 = vmatpush1.msra.mxu0 %v43
    %55 = vmatprep.subr.mxu0 0.0
    %56 = vmatpush1.msra.mxu0 0.0
    %57 = vmatprep.subr.mxu0 0.0
    %58 = vmatpush1.msra.mxu0 0.0
    %59 = vmatprep.subr.mxu0 0.0
    %60 = vmatpush1.msra.mxu0 0.0
    %61 = vmatprep.subr.mxu0 0.0
    %62 = vmatpush1.msra.mxu0 0.0
    %63 = vmatprep.subr.mxu0 0.0
    %64 = vmatpush1.msra.mxu0 0.0
    %65 = vmatprep.subr.mxu0 0.0
    %66 = vmatpush1.msra.mxu0 0.0
    %67 = vmatprep.subr.mxu0 0.0
    %68 = vmatpush1.msra.mxu0 0.0
    %69 = vmatprep.subr.mxu0 0.0
    %70 = vmatpush1.msra.mxu0 0.0
    %71 = vmatprep.subr.mxu0 0.0
    %72 = vmatpush1.msra.mxu0 0.0
    %73 = vmatprep.subr.mxu0 0.0
    %74 = vmatpush1.msra.mxu0 0.0
    %75 = vmatprep.subr.mxu0 0.0
    %76 = vmatpush1.msra.mxu0 0.0
    %77 = vmatprep.subr.mxu0 0.0
    %78 = vmatpush1.msra.mxu0 0.0
    %79 = vmatprep.subr.mxu0 0.0
    %80 = vmatpush1.msra.mxu0 0.0
    %81 = vmatprep.subr.mxu0 0.0
    %82 = vmatpush1.msra.mxu0 0.0
    %83 = vmatprep.subr.mxu0 0.0
    %84 = vmatpush1.msra.mxu0 0.0
    %85 = vmatprep.subr.mxu0 0.0
    %86 = vmatpush1.msra.mxu0 0.0
    %87 = vmatprep.subr.mxu0 0.0
    %88 = vmatpush1.msra.mxu0 0.0
    %89 = vmatprep.subr.mxu0 0.0
    %90 = vmatpush1.msra.mxu0 0.0
    %91 = vmatprep.subr.mxu0 0.0
    %92 = vmatpush1.msra.mxu0 0.0
    %93 = vmatprep.subr.mxu0 0.0
    %94 = vmatpush1.msra.mxu0 0.0
    %95 = vmatprep.subr.mxu0 0.0
    %96 = vmatpush1.msra.mxu0 0.0
    %97 = vmatprep.subr.mxu0 0.0
    %98 = vmatpush1.msra.mxu0 0.0
    %99 = vmatprep.subr.mxu0 0.0
    %100 = vmatpush1.msra.mxu0 0.0
    %101 = vmatprep.subr.mxu0 0.0
    %102 = vmatpush1.msra.mxu0 0.0
    %103 = vmatprep.subr.mxu0 0.0
    %104 = vmatpush1.msra.mxu0 0.0
    %105 = vmatprep.subr.mxu0 0.0
    %106 = vmatpush1.msra.mxu0 0.0
    %107 = vmatprep.subr.mxu0 0.0
    %108 = vmatpush1.msra.mxu0 0.0
    %109 = vmatprep.subr.mxu0 0.0
    %110 = vmatpush1.msra.mxu0 0.0
    %111 = vmatprep.subr.mxu0 0.0
    %112 = vmatpush1.msra.mxu0 0.0
    %113 = vmatprep.subr.mxu0 0.0
    %114 = vmatpush1.msra.mxu0 0.0
    %115 = vmatprep.mubr.f32.mxu0 0.0
    %116 = vmatmul.mubr.f32.gmra.mrb[0].mxu0 %v46
    %v117 = vpop.f32.mrb[0].mxu0
    %v118 = vadd.f32 0.0, %v117
    %v119 = vpop.f32.mrb[0].mxu0
    %120 = vmatprep.mubr.f32.mxu0 0.0
    %121 = vmatmul.mubr.f32.gmra.mrb[0].mxu0 %v49
    %v122 = vpop.f32.mrb[0].mxu0
    %v123 = vadd.f32 0.0, %v122
    %v124 = vpop.f32.mrb[0].mxu0
    %125 = vdwg.mxu0
    %vm126 = vcmask 261120
    %127 = vst.msk [vmem:[#allocation7] sm:$0xff] %vm126, %v118
    %128 = vst.msk [vmem:[#allocation7 + $0x8] sm:$0xff] %vm126, %v123
    // Predicated region
    $region18: #{tpu_custom_call.1} parent=1 // pred_check
      _
    $region19: #{tpu_custom_call.1} parent=1 // pred_check_branch
      %130 = sbr.rel (0) target = $region21
    $region20: #{tpu_custom_call.1} parent=1 // pred_region
      %s132 = ssub.s32 256, 256
      %133 = vsyncadd [#allocation4], %s132
      %s134 = sshll.u32 [#allocation7], 4
      %s135 = int_to_ptr.vmem [resolvable:$true] %s134
      %140 = dma.vmem_to_hbm [thread:$0]  %s135, 256, %s2, [#allocation4], 128, 128, 8
    $region21: #{tpu_custom_call.1} parent=1 // pred_fallthru
      _
    // Predicated region
    $region22: #{tpu_custom_call.1} parent=1 // pred_check
      _
    $region23: #{tpu_custom_call.1} parent=1 // pred_check_branch
      %142 = sbr.rel (0) target = $region25
    $region24: #{tpu_custom_call.1} parent=1 // pred_region
      %143 = dma.done [#allocation4], 256
    $region25: #{tpu_custom_call.1} parent=1 // pred_fallthru
      _
    %144 = vsyncpa [#allocation3], 1
    %145 = vsyncpa [#allocation6], 1
    %146 = vsyncpa [#allocation4], 1

</llo_original>
